<compile_context>
chip_gen: v6e
topology: v6e:2x2x1
jax: 0.10.0
libtpu: 0.0.40
codegen_flags: <defaults>
</compile_context>

<pallas_src>
import functools

import jax
import jax.numpy as jnp
from jax import lax
from jax.experimental import pallas as pl
from jax.experimental.pallas import tpu as pltpu


def value_net_kernel(x_ref, w1_ref, b1_ref, w2_ref, b2_ref, w3_ref, b3_ref, o_ref):
    """Fused 3-layer MLP forward on one batch tile.

    x_ref : (bm, state_dim) f32
    w1_ref: (state_dim, H) f32|bf16      b1_ref: (1, H) f32
    w2_ref: (H, H)        f32|bf16       b2_ref: (1, H) f32
    w3_ref: (1, H) f32 (row vector)      b3_ref: (1, 1) f32 in SMEM
    o_ref : (1, bm) f32   (lane-dense row of per-example values)
    """
    # Layer 1: MXU matmul, f32 accumulation. astype is a no-op on the f32 path;
    # on the bf16 path the cast rides the otherwise idle VPU slot.
    x = x_ref[...].astype(w1_ref.dtype)
    h1 = jnp.dot(x, w1_ref[...], preferred_element_type=jnp.float32) + b1_ref[...]
    h1 = jnp.maximum(h1, 0.0)

    # Layer 2: MXU matmul, f32 accumulation.
    h2 = jnp.dot(h1.astype(w2_ref.dtype), w2_ref[...],
                 preferred_element_type=jnp.float32) + b2_ref[...]
    h2 = jnp.maximum(h2, 0.0)

    # Layer 3 (H -> 1), kept in f32: contract w3 (1,H) with h2 (bm,H) over the
    # feature axis so the result is a lane-dense (1, bm) row -- no (bm,1) column,
    # no masked partial stores, no in-kernel transpose.
    # TODO(synk): on v5e/v6e a weight-stationary matmul_push_rhs/acc_lhs form for
    # w1/w2 could shave a few % by not re-streaming the RHS each grid step.
    out_row = lax.dot_general(
        w3_ref[...], h2,
        dimension_numbers=(((1,), (1,)), ((), ())),
        preferred_element_type=jnp.float32,
    ) + b3_ref[0, 0]
    o_ref[...] = out_row.astype(o_ref.dtype)


def _round_up(n, m):
    return ((n + m - 1) // m) * m


def _ceil_div(a, b):
    return -(-a // b)


def _choose_tiling(B, bm):
    """Pick (n_tiles, bm_eff) for the batch axis.

    - Single tile (block == full array) for small B.
    - Once B >= 256: at least 2 tiles (rounded to an even count) so the 'parallel'
      grid axis shards across both v7x TensorCores; tile size balanced over B and
      rounded up to a multiple of 128 so the lane-dense output blocks stay aligned.
    """
    n_tiles = _ceil_div(B, max(bm, 128))
    if B >= 256:
        n_tiles = max(n_tiles, 2)
        n_tiles += n_tiles % 2                      # even grid -> balanced megacore
    if n_tiles == 1:
        bm_eff = _round_up(B, 8)
    else:
        bm_eff = _round_up(_ceil_div(B, n_tiles), 128)
        n_tiles = _ceil_div(B, bm_eff)
    return n_tiles, bm_eff


@functools.partial(jax.jit, static_argnames=("bm", "use_bf16"))
def value_network_forward(x, params, *, bm=1024, use_bf16=False):
    """x: (B, state_dim) float32. Returns (B, 1) float32 values."""
    w1, b1, w2, b2, w3, b3 = params
    B, state_dim = x.shape
    H = w1.shape[1]  # 128

    mat_dtype = jnp.bfloat16 if use_bf16 else jnp.float32
    w1_m = w1.astype(mat_dtype)
    w2_m = w2.astype(mat_dtype)
    w3_row = w3.reshape(1, H).astype(jnp.float32)   # layer 3 stays f32
    b1_r = b1.reshape(1, H).astype(jnp.float32)
    b2_r = b2.reshape(1, H).astype(jnp.float32)
    b3_s = b3.reshape(1, 1).astype(jnp.float32)

    n_tiles, bm_eff = _choose_tiling(B, bm)
    B_pad = n_tiles * bm_eff
    if B_pad != B:
        x = jnp.pad(x, ((0, B_pad - B), (0, 0)))

    out_row = pl.pallas_call(
        value_net_kernel,
        out_shape=jax.ShapeDtypeStruct((1, B_pad), jnp.float32),
        grid_spec=pltpu.PrefetchScalarGridSpec(
            num_scalar_prefetch=0,
            grid=(n_tiles,),
            in_specs=[
                pl.BlockSpec((bm_eff, state_dim), lambda i: (i, 0)),   # x tile (streamed)
                pl.BlockSpec((state_dim, H), lambda i: (0, 0)),        # w1 (resident)
                pl.BlockSpec((1, H), lambda i: (0, 0)),                # b1
                pl.BlockSpec((H, H), lambda i: (0, 0)),                # w2 (resident)
                pl.BlockSpec((1, H), lambda i: (0, 0)),                # b2
                pl.BlockSpec((1, H), lambda i: (0, 0)),                # w3 row
                pl.BlockSpec(memory_space=pltpu.MemorySpace.SMEM),     # b3 scalar
            ],
            out_specs=pl.BlockSpec((1, bm_eff), lambda i: (0, i)),     # lane-dense row
        ),
        compiler_params=pltpu.CompilerParams(
            dimension_semantics=("parallel",),   # batch axis shards across TCs
        ),
    )(x, w1_m, b1_r, w2_m, b2_r, w3_row, b3_s)

    # Padded rows carry relu(bias)-propagated garbage by design; slice them away.
    return out_row[0, :B].reshape(B, 1)


def init_params(key, state_dim, hidden=128):
    """Deterministic init mimicking PyTorch nn.Linear default:
    U(-1/sqrt(fan_in), 1/sqrt(fan_in)) for both weights and biases."""
    ks = jax.random.split(key, 6)

    def linear(kw, kb, fan_in, fan_out):
        bound = 1.0 / jnp.sqrt(jnp.float32(fan_in))
        w = jax.random.uniform(kw, (fan_in, fan_out), jnp.float32, -bound, bound)
        b = jax.random.uniform(kb, (1, fan_out), jnp.float32, -bound, bound)
        return w, b

    w1, b1 = linear(ks[0], ks[1], state_dim, hidden)
    w2, b2 = linear(ks[2], ks[3], hidden, hidden)
    w3, b3 = linear(ks[4], ks[5], hidden, 1)
    return (w1, b1, w2, b2, w3, b3)


def value_network_ref(x, params):
    """Pure-JAX f32 reference of the PyTorch forward (highest-precision dots)."""
    w1, b1, w2, b2, w3, b3 = params
    hp = jax.lax.Precision.HIGHEST
    h1 = jnp.maximum(jnp.dot(x, w1, precision=hp) + b1, 0.0)
    h2 = jnp.maximum(jnp.dot(h1, w2, precision=hp) + b2, 0.0)
    return jnp.dot(h2, w3, precision=hp) + b3


if __name__ == "__main__":
    key = jax.random.PRNGKey(0)
    k_param, k_x1, k_x2 = jax.random.split(key, 3)

    state_dim = 8
    params = init_params(k_param, state_dim)

    # --- Small ragged batch: single-tile path. ---
    x_small = jax.random.normal(k_x1, (37, state_dim), dtype=jnp.float32)
    out_small = jax.block_until_ready(value_network_forward(x_small, params))
    assert out_small.shape == (37, 1)
    ref_small = value_network_ref(x_small, params)
    assert jnp.allclose(out_small, ref_small, atol=1e-2, rtol=1e-2), \
        "f32 kernel mismatch vs f32 reference (small batch)"

    # --- Larger ragged batch: multi-tile, lane-dense multi-block output path. ---
    x_big = jax.random.normal(k_x2, (300, state_dim), dtype=jnp.float32)
    out_big = jax.block_until_ready(value_network_forward(x_big, params))
    assert out_big.shape == (300, 1)
    ref_big = value_network_ref(x_big, params)
    assert jnp.allclose(out_big, ref_big, atol=1e-2, rtol=1e-2), \
        "f32 kernel mismatch vs f32 reference (multi-tile batch)"

    # --- Optional bf16-operand path (f32 accumulation): looser semantic check. ---
    out_bf16 = jax.block_until_ready(
        value_network_forward(x_small, params, use_bf16=True))
    assert out_bf16.shape == (37, 1)
    assert jnp.allclose(out_bf16, ref_small, atol=5e-2, rtol=5e-2), \
        "bf16 kernel mismatch vs f32 reference"

    print("KERNEL_OK")
</pallas_src>

<mosaic_0001>
module attributes {stable_mosaic.version = 11 : i64} {
  func.func @value_net_kernel(%arg0: i32, %arg1: memref<40x8xf32, #tpu.memory_space<vmem>>, %arg2: memref<8x128xf32, #tpu.memory_space<vmem>>, %arg3: memref<1x128xf32, #tpu.memory_space<vmem>>, %arg4: memref<128x128xf32, #tpu.memory_space<vmem>>, %arg5: memref<1x128xf32, #tpu.memory_space<vmem>>, %arg6: memref<1x128xf32, #tpu.memory_space<vmem>>, %arg7: memref<1x1xf32, #tpu.memory_space<smem>>, %arg8: memref<1x40xf32, #tpu.memory_space<vmem>>) attributes {dimension_semantics = [#tpu.dimension_semantics<parallel>], iteration_bounds = array<i64: 1>, scalar_prefetch = 0 : i64, scratch_operands = 0 : i64, tpu.core_type = #tpu.core_type<tc>, window_params = [{transform_indices = @transform_0, window_bounds = array<i64: 40, 8>}, {pipeline_mode = #tpu.pipeline_mode<synchronous>, transform_indices = @transform_1, window_bounds = array<i64: 8, 128>}, {pipeline_mode = #tpu.pipeline_mode<synchronous>, transform_indices = @transform_2, window_bounds = array<i64: 1, 128>}, {pipeline_mode = #tpu.pipeline_mode<synchronous>, transform_indices = @transform_3, window_bounds = array<i64: 128, 128>}, {pipeline_mode = #tpu.pipeline_mode<synchronous>, transform_indices = @transform_4, window_bounds = array<i64: 1, 128>}, {pipeline_mode = #tpu.pipeline_mode<synchronous>, transform_indices = @transform_5, window_bounds = array<i64: 1, 128>}, {transform_indices = @transform_6, window_bounds = array<i64: 1, 1>}, {transform_indices = @transform_7, window_bounds = array<i64: 1, 40>}]} {
    %c0 = arith.constant 0 : index
    %c0_0 = arith.constant 0 : index
    %0 = vector.load %arg1[%c0, %c0_0] : memref<40x8xf32, #tpu.memory_space<vmem>>, vector<40x8xf32>
    %c0_1 = arith.constant 0 : index
    %c0_2 = arith.constant 0 : index
    %1 = vector.load %arg2[%c0_1, %c0_2] : memref<8x128xf32, #tpu.memory_space<vmem>>, vector<8x128xf32>
    %cst = arith.constant dense<0.000000e+00> : vector<40x128xf32>
    %2 = tpu.matmul %0, %1, %cst {dimension_numbers = #tpu.dot_dimension_numbers<[1], [0], [0], [1], [0, 0, 1, 1], [], []>} : vector<40x8xf32>, vector<8x128xf32>, vector<40x128xf32> -> vector<40x128xf32>
    %c0_3 = arith.constant 0 : index
    %c0_4 = arith.constant 0 : index
    %3 = vector.load %arg3[%c0_3, %c0_4] : memref<1x128xf32, #tpu.memory_space<vmem>>, vector<1x128xf32>
    %4 = vector.broadcast %3 : vector<1x128xf32> to vector<40x128xf32>
    %5 = arith.addf %2, %4 : vector<40x128xf32>
    %cst_5 = arith.constant 0.000000e+00 : f32
    %6 = vector.broadcast %cst_5 : f32 to vector<40x128xf32>
    %7 = arith.maximumf %5, %6 : vector<40x128xf32>
    %c0_6 = arith.constant 0 : index
    %c0_7 = arith.constant 0 : index
    %8 = vector.load %arg4[%c0_6, %c0_7] : memref<128x128xf32, #tpu.memory_space<vmem>>, vector<128x128xf32>
    %cst_8 = arith.constant dense<0.000000e+00> : vector<40x128xf32>
    %9 = tpu.matmul %7, %8, %cst_8 {dimension_numbers = #tpu.dot_dimension_numbers<[1], [0], [0], [1], [0, 0, 1, 1], [], []>} : vector<40x128xf32>, vector<128x128xf32>, vector<40x128xf32> -> vector<40x128xf32>
    %c0_9 = arith.constant 0 : index
    %c0_10 = arith.constant 0 : index
    %10 = vector.load %arg5[%c0_9, %c0_10] : memref<1x128xf32, #tpu.memory_space<vmem>>, vector<1x128xf32>
    %11 = vector.broadcast %10 : vector<1x128xf32> to vector<40x128xf32>
    %12 = arith.addf %9, %11 : vector<40x128xf32>
    %cst_11 = arith.constant 0.000000e+00 : f32
    %13 = vector.broadcast %cst_11 : f32 to vector<40x128xf32>
    %14 = arith.maximumf %12, %13 : vector<40x128xf32>
    %c0_12 = arith.constant 0 : index
    %c0_13 = arith.constant 0 : index
    %15 = vector.load %arg6[%c0_12, %c0_13] : memref<1x128xf32, #tpu.memory_space<vmem>>, vector<1x128xf32>
    %cst_14 = arith.constant dense<0.000000e+00> : vector<1x40xf32>
    %16 = tpu.matmul %15, %14, %cst_14 {dimension_numbers = #tpu.dot_dimension_numbers<[1], [1], [0], [0], [0, 0, 1, 0], [], []>} : vector<1x128xf32>, vector<40x128xf32>, vector<1x40xf32> -> vector<1x40xf32>
    %c0_15 = arith.constant 0 : index
    %c0_16 = arith.constant 0 : index
    %17 = memref.load %arg7[%c0_15, %c0_16] : memref<1x1xf32, #tpu.memory_space<smem>>
    %18 = vector.broadcast %17 : f32 to vector<1x40xf32>
    %19 = arith.addf %16, %18 : vector<1x40xf32>
    %c0_17 = arith.constant 0 : index
    %c0_18 = arith.constant 0 : index
    %20 = vector.load %arg8[%c0_17, %c0_18] : memref<1x40xf32, #tpu.memory_space<vmem>>, vector<1x40xf32>
    tpu.vector_store %arg8[%c0_17, %c0_18], %19 {strides = array<i32>} : memref<1x40xf32, #tpu.memory_space<vmem>>, vector<1x40xf32>,
    return
  }
  func.func @transform_0(%arg0: i32) -> (i32, i32) {
    %c0_i32 = arith.constant 0 : i32
    %c0_i32_0 = arith.constant 0 : i32
    return %arg0, %c0_i32 : i32, i32
  }
  func.func @transform_1(%arg0: i32) -> (i32, i32) {
    %c0_i32 = arith.constant 0 : i32
    %c0_i32_0 = arith.constant 0 : i32
    %c0_i32_1 = arith.constant 0 : i32
    return %c0_i32, %c0_i32_0 : i32, i32
  }
  func.func @transform_2(%arg0: i32) -> (i32, i32) {
    %c0_i32 = arith.constant 0 : i32
    %c0_i32_0 = arith.constant 0 : i32
    %c0_i32_1 = arith.constant 0 : i32
    return %c0_i32, %c0_i32_0 : i32, i32
  }
  func.func @transform_3(%arg0: i32) -> (i32, i32) {
    %c0_i32 = arith.constant 0 : i32
    %c0_i32_0 = arith.constant 0 : i32
    %c0_i32_1 = arith.constant 0 : i32
    return %c0_i32, %c0_i32_0 : i32, i32
  }
  func.func @transform_4(%arg0: i32) -> (i32, i32) {
    %c0_i32 = arith.constant 0 : i32
    %c0_i32_0 = arith.constant 0 : i32
    %c0_i32_1 = arith.constant 0 : i32
    return %c0_i32, %c0_i32_0 : i32, i32
  }
  func.func @transform_5(%arg0: i32) -> (i32, i32) {
    %c0_i32 = arith.constant 0 : i32
    %c0_i32_0 = arith.constant 0 : i32
    %c0_i32_1 = arith.constant 0 : i32
    return %c0_i32, %c0_i32_0 : i32, i32
  }
  func.func @transform_6(%arg0: i32) -> (i32, i32) {
    %c0_i32 = arith.constant 0 : i32
    %c0_i32_0 = arith.constant 0 : i32
    %c0_i32_1 = arith.constant 0 : i32
    return %c0_i32, %c0_i32_0 : i32, i32
  }
  func.func @transform_7(%arg0: i32) -> (i32, i32) {
    %c0_i32 = arith.constant 0 : i32
    %c0_i32_0 = arith.constant 0 : i32
    return %c0_i32, %arg0 : i32, i32
  }
}

</mosaic_0001>

<llo_original>
// kernel: value_network_forward.1
$region0: #{value_network_forward.1}
  #allocation0 [shape = 'u32[]', space=smem, size = 0x4, offset = 0x4, fixed_abs, tag = 'smem constant byte address 0x4 - core index']
  #allocation1 [shape = 'u32[144,128]{1,0:T(1,128)}', space=vmem, size = 0x12000, scoped, tag = 'internal scratch']
  #allocation2 [shape = 'f32[1,1]{1,0:T(1,128)S(6)}', space=smem, size = 0x200, scoped, tag = 'scoped memory for value_network_forward.1']
  %s0 = inlined_call_operand.vmem [shape: f32[40,8], index: 0, kind: input, shape index: {}]
  %s1 = inlined_call_operand.hbm [shape: f32[8,128], index: 1, kind: input, shape index: {}]
  %s2 = inlined_call_operand.vmem [shape: f32[1,128], index: 2, kind: input, shape index: {}]
  %s3 = inlined_call_operand.vmem [shape: f32[128,128], index: 3, kind: input, shape index: {}]
  %s4 = inlined_call_operand.vmem [shape: f32[1,128], index: 4, kind: input, shape index: {}]
  %s5 = inlined_call_operand.vmem [shape: f32[1,128], index: 5, kind: input, shape index: {}]
  %s6 = inlined_call_operand.<no memory space> [shape: f32[1,1], index: 6, kind: input, shape index: {}]
  %s7 = inlined_call_operand.vmem [shape: f32[1,40], index: 7, kind: output, shape index: {}]
  %s8 = sld [smem:[#allocation0]]
  $region42: #{value_network_forward.1} parent=0
    _
  %s10 = ssub.s32 1, %s8
  %s11 = scalar_select 0, %s10, %s8
  %12 = sst [smem:[#allocation2]] %s6
  $region1: #{value_network_forward.1} parent=0
    #allocation3 [shape = 'u8[4096]{0}', space=vmem, size = 0x1000, scoped, tag = 'input window, operand 1, single buffered']
    #allocation4 [shape = 's32[1]{0}', space=sflag, size = 0x4, scoped, tag = 'scoped memory for value_network_forward.1']
    %13 = vsyncpa [#allocation4], 0
    // Predicated region
    $region2: #{value_network_forward.1} parent=1 // pred_check
      _
    $region3: #{value_network_forward.1} parent=1 // pred_check_branch
      %15 = sbr.rel (0) target = $region5
    $region4: #{value_network_forward.1} parent=1 // pred_region
      _
    $region5: #{value_network_forward.1} parent=1 // pred_fallthru
      _
    // Predicated region
    $region6: #{value_network_forward.1} parent=1 // pred_check
      _
    $region7: #{value_network_forward.1} parent=1 // pred_check_branch
      %17 = sbr.rel (0) target = $region9
    $region8: #{value_network_forward.1} parent=1 // pred_region
      %s19 = ssub.s32 128, 128
      %20 = vsyncadd [#allocation4], %s19
      %s22 = sshll.u32 [#allocation3], 4
      %s23 = int_to_ptr.vmem [resolvable:$true] %s22
      %25 = dma.hbm_to_vmem [thread:$0]  %s1, 128, %s23, [#allocation4]
    $region9: #{value_network_forward.1} parent=1 // pred_fallthru
      _
    // Predicated region
    $region10: #{value_network_forward.1} parent=1 // pred_check
      _
    $region11: #{value_network_forward.1} parent=1 // pred_check_branch
      %27 = sbr.rel (0) target = $region13
    $region12: #{value_network_forward.1} parent=1 // pred_region
      _
    $region13: #{value_network_forward.1} parent=1 // pred_fallthru
      _
    // Predicated region
    $region14: #{value_network_forward.1} parent=1 // pred_check
      _
    $region15: #{value_network_forward.1} parent=1 // pred_check_branch
      %29 = sbr.rel (0) target = $region17
    $region16: #{value_network_forward.1} parent=1 // pred_region
      _
    $region17: #{value_network_forward.1} parent=1 // pred_fallthru
      _
    // Predicated region
    $region18: #{value_network_forward.1} parent=1 // pred_check
      _
    $region19: #{value_network_forward.1} parent=1 // pred_check_branch
      %31 = sbr.rel (0) target = $region21
    $region20: #{value_network_forward.1} parent=1 // pred_region
      _
    $region21: #{value_network_forward.1} parent=1 // pred_fallthru
      _
    // Predicated region
    $region22: #{value_network_forward.1} parent=1 // pred_check
      _
    $region23: #{value_network_forward.1} parent=1 // pred_check_branch
      %33 = sbr.rel (0) target = $region25
    $region24: #{value_network_forward.1} parent=1 // pred_region
      _
    $region25: #{value_network_forward.1} parent=1 // pred_fallthru
      _
    // Predicated region
    $region26: #{value_network_forward.1} parent=1 // pred_check
      _
    $region27: #{value_network_forward.1} parent=1 // pred_check_branch
      %35 = sbr.rel (0) target = $region29
    $region28: #{value_network_forward.1} parent=1 // pred_region
      _
    $region29: #{value_network_forward.1} parent=1 // pred_fallthru
      _
    // Predicated region
    $region30: #{value_network_forward.1} parent=1 // pred_check
      _
    $region31: #{value_network_forward.1} parent=1 // pred_check_branch
      %37 = sbr.rel (0) target = $region33
    $region32: #{value_network_forward.1} parent=1 // pred_region
      %38 = dma.done [#allocation4], 128
    $region33: #{value_network_forward.1} parent=1 // pred_fallthru
      _
    %v39 = vld [vmem:[%s0] sm:$0xff]
    %v40 = vld [vmem:[%s0 + $0x8] sm:$0xff]
    %v41 = vld [vmem:[%s0 + $0x10] sm:$0xff]
    %v42 = vld [vmem:[%s0 + $0x18] sm:$0xff]
    %v43 = vld [vmem:[%s0 + $0x20] sm:$0xff]
    %v44 = vld [vmem:[#allocation3] sm:$0xff]
    %v45 = vld [vmem:[%s2] sm:$0x1]
    %v47 = vlaneseq
    %v48 = vshrl.u32 %v47, 7
    %v49 = vsub.s32 0, %v48
    %v50 = vrot.slane %v45, %v49
    %vm52 = vcmask 64512
    %v54 = vsel %vm52, %v39, 0
    %v57 = vsel %vm52, %v40, 0
    %v60 = vsel %vm52, %v41, 0
    %v63 = vsel %vm52, %v42, 0
    %v66 = vsel %vm52, %v43, 0
    %68 = vmatprep.subr.mxu0 0.0
    %69 = vmatpush1.msra.mxu0 0.0
    %70 = vmatprep.subr.mxu0 0.0
    %71 = vmatpush1.msra.mxu0 0.0
    %72 = vmatprep.subr.mxu0 0.0
    %73 = vmatpush1.msra.mxu0 0.0
    %74 = vmatprep.subr.mxu0 0.0
    %75 = vmatpush1.msra.mxu0 0.0
    %76 = vmatprep.subr.mxu0 0.0
    %77 = vmatpush1.msra.mxu0 0.0
    %78 = vmatprep.subr.mxu0 0.0
    %79 = vmatpush1.msra.mxu0 0.0
    %80 = vmatprep.subr.mxu0 0.0
    %81 = vmatpush1.msra.mxu0 0.0
    %82 = vmatprep.subr.mxu0 0.0
    %83 = vmatpush1.msra.mxu0 0.0
    %84 = vmatprep.subr.mxu0 0.0
    %85 = vmatpush1.msra.mxu0 0.0
    %86 = vmatprep.subr.mxu0 0.0
    %87 = vmatpush1.msra.mxu0 0.0
    %88 = vmatprep.subr.mxu0 0.0
    %89 = vmatpush1.msra.mxu0 0.0
    %90 = vmatprep.subr.mxu0 0.0
    %91 = vmatpush1.msra.mxu0 0.0
    %92 = vmatprep.subr.mxu0 0.0
    %93 = vmatpush1.msra.mxu0 0.0
    %94 = vmatprep.subr.mxu0 0.0
    %95 = vmatpush1.msra.mxu0 0.0
    %96 = vmatprep.subr.mxu0 0.0
    %97 = vmatpush1.msra.mxu0 0.0
    %98 = vmatprep.subr.mxu0 0.0
    %99 = vmatpush1.msra.mxu0 %v44
    %100 = vmatprep.subr.mxu0 0.0
    %101 = vmatpush2.msra.mxu0 0.0
    %102 = vmatprep.subr.mxu0 0.0
    %103 = vmatpush2.msra.mxu0 0.0
    %104 = vmatprep.subr.mxu0 0.0
    %105 = vmatpush2.msra.mxu0 0.0
    %106 = vmatprep.subr.mxu0 0.0
    %107 = vmatpush2.msra.mxu0 0.0
    %108 = vmatprep.subr.mxu0 0.0
    %109 = vmatpush2.msra.mxu0 0.0
    %110 = vmatprep.subr.mxu0 0.0
    %111 = vmatpush2.msra.mxu0 0.0
    %112 = vmatprep.subr.mxu0 0.0
    %113 = vmatpush2.msra.mxu0 0.0
    %114 = vmatprep.subr.mxu0 0.0
    %115 = vmatpush2.msra.mxu0 0.0
    %116 = vmatprep.subr.mxu0 0.0
    %117 = vmatpush2.msra.mxu0 0.0
    %118 = vmatprep.subr.mxu0 0.0
    %119 = vmatpush2.msra.mxu0 0.0
    %120 = vmatprep.subr.mxu0 0.0
    %121 = vmatpush2.msra.mxu0 0.0
    %122 = vmatprep.subr.mxu0 0.0
    %123 = vmatpush2.msra.mxu0 0.0
    %124 = vmatprep.subr.mxu0 0.0
    %125 = vmatpush2.msra.mxu0 0.0
    %126 = vmatprep.subr.mxu0 0.0
    %127 = vmatpush2.msra.mxu0 0.0
    %128 = vmatprep.subr.mxu0 0.0
    %129 = vmatpush2.msra.mxu0 0.0
    %130 = vmatprep.subr.mxu0 0.0
    %131 = vmatpush2.msra.mxu0 0.0
    %132 = vmatprep.mubr.f32.mxu0 0.0
    %133 = vmatmul.mubr.f32.gmra.mxu0 %v54
    %v134 = vpop.f32.mrf.mxu0
    %v135 = vadd.f32 %v50, %v134
    %v136 = vpop.f32.mrf.mxu0
    %137 = vmatprep.mubr.f32.mxu0 0.0
    %138 = vmatmul.mubr.f32.gmra.mxu0 %v57
    %v139 = vpop.f32.mrf.mxu0
    %v140 = vadd.f32 %v50, %v139
    %v141 = vpop.f32.mrf.mxu0
    %142 = vmatprep.mubr.f32.mxu0 0.0
    %143 = vmatmul.mubr.f32.gmra.mxu0 %v60
    %v144 = vpop.f32.mrf.mxu0
    %v145 = vadd.f32 %v50, %v144
    %v146 = vpop.f32.mrf.mxu0
    %147 = vmatprep.mubr.f32.mxu0 0.0
    %148 = vmatmul.mubr.f32.gmra.mxu0 %v63
    %v149 = vpop.f32.mrf.mxu0
    %v150 = vadd.f32 %v50, %v149
    %v151 = vpop.f32.mrf.mxu0
    %152 = vmatprep.mubr.f32.mxu0 0.0
    %153 = vmatmul.mubr.f32.gmra.mxu0 %v66
    %v154 = vpop.f32.mrf.mxu0
    %v155 = vadd.f32 %v50, %v154
    %v156 = vpop.f32.mrf.mxu0
    %157 = vdwg.mxu0
    %v158 = vmax.f32 %v135, 0.0
    %v159 = vmax.f32 %v140, 0.0
    %v160 = vmax.f32 %v145, 0.0
    %v161 = vmax.f32 %v150, 0.0
    %v162 = vmax.f32 %v155, 0.0
    %v163 = vld [vmem:[%s3] sm:$0xff]
    %v164 = vld [vmem:[%s3 + $0x8] sm:$0xff]
    %v165 = vld [vmem:[%s3 + $0x10] sm:$0xff]
    %v166 = vld [vmem:[%s3 + $0x18] sm:$0xff]
    %v167 = vld [vmem:[%s3 + $0x20] sm:$0xff]
    %v168 = vld [vmem:[%s3 + $0x28] sm:$0xff]
    %v169 = vld [vmem:[%s3 + $0x30] sm:$0xff]
    %v170 = vld [vmem:[%s3 + $0x38] sm:$0xff]
    %v171 = vld [vmem:[%s3 + $0x40] sm:$0xff]
    %v172 = vld [vmem:[%s3 + $0x48] sm:$0xff]
    %v173 = vld [vmem:[%s3 + $0x50] sm:$0xff]
    %v174 = vld [vmem:[%s3 + $0x58] sm:$0xff]
    %v175 = vld [vmem:[%s3 + $0x60] sm:$0xff]
    %v176 = vld [vmem:[%s3 + $0x68] sm:$0xff]
    %v177 = vld [vmem:[%s3 + $0x70] sm:$0xff]
    %v178 = vld [vmem:[%s3 + $0x78] sm:$0xff]
    %v179 = vld [vmem:[%s4] sm:$0x1]
    %v181 = vlaneseq
    %v182 = vshrl.u32 %v181, 7
    %v183 = vsub.s32 0, %v182
    %v184 = vrot.slane %v179, %v183
    %186 = vmatprep.subr.mxu0 0.0
    %187 = vmatpush1.msra.mxu0 %v178
    %188 = vmatprep.subr.mxu0 0.0
    %189 = vmatpush1.msra.mxu0 %v177
    %190 = vmatprep.subr.mxu0 0.0
    %191 = vmatpush1.msra.mxu0 %v176
    %192 = vmatprep.subr.mxu0 0.0
    %193 = vmatpush1.msra.mxu0 %v175
    %194 = vmatprep.subr.mxu0 0.0
    %195 = vmatpush1.msra.mxu0 %v174
    %196 = vmatprep.subr.mxu0 0.0
    %197 = vmatpush1.msra.mxu0 %v173
    %198 = vmatprep.subr.mxu0 0.0
    %199 = vmatpush1.msra.mxu0 %v172
    %200 = vmatprep.subr.mxu0 0.0
    %201 = vmatpush1.msra.mxu0 %v171
    %202 = vmatprep.subr.mxu0 0.0
    %203 = vmatpush1.msra.mxu0 %v170
    %204 = vmatprep.subr.mxu0 0.0
    %205 = vmatpush1.msra.mxu0 %v169
    %206 = vmatprep.subr.mxu0 0.0
    %207 = vmatpush1.msra.mxu0 %v168
    %208 = vmatprep.subr.mxu0 0.0
    %209 = vmatpush1.msra.mxu0 %v167
    %210 = vmatprep.subr.mxu0 0.0
    %211 = vmatpush1.msra.mxu0 %v166
    %212 = vmatprep.subr.mxu0 0.0
    %213 = vmatpush1.msra.mxu0 %v165
    %214 = vmatprep.subr.mxu0 0.0
    %215 = vmatpush1.msra.mxu0 %v164
    %216 = vmatprep.subr.mxu0 0.0
    %217 = vmatpush1.msra.mxu0 %v163
    %218 = vmatprep.subr.mxu0 0.0
    %219 = vmatpush2.msra.mxu0 0.0
    %220 = vmatprep.subr.mxu0 0.0
    %221 = vmatpush2.msra.mxu0 0.0
    %222 = vmatprep.subr.mxu0 0.0
    %223 = vmatpush2.msra.mxu0 0.0
    %224 = vmatprep.subr.mxu0 0.0
    %225 = vmatpush2.msra.mxu0 0.0
    %226 = vmatprep.subr.mxu0 0.0
    %227 = vmatpush2.msra.mxu0 0.0
    %228 = vmatprep.subr.mxu0 0.0
    %229 = vmatpush2.msra.mxu0 0.0
    %230 = vmatprep.subr.mxu0 0.0
    %231 = vmatpush2.msra.mxu0 0.0
    %232 = vmatprep.subr.mxu0 0.0
    %233 = vmatpush2.msra.mxu0 0.0
    %234 = vmatprep.subr.mxu0 0.0
    %235 = vmatpush2.msra.mxu0 0.0
    %236 = vmatprep.subr.mxu0 0.0
    %237 = vmatpush2.msra.mxu0 0.0
    %238 = vmatprep.subr.mxu0 0.0
    %239 = vmatpush2.msra.mxu0 0.0
    %240 = vmatprep.subr.mxu0 0.0
    %241 = vmatpush2.msra.mxu0 0.0
    %242 = vmatprep.subr.mxu0 0.0
    %243 = vmatpush2.msra.mxu0 0.0
    %244 = vmatprep.subr.mxu0 0.0
    %245 = vmatpush2.msra.mxu0 0.0
    %246 = vmatprep.subr.mxu0 0.0
    %247 = vmatpush2.msra.mxu0 0.0
    %248 = vmatprep.subr.mxu0 0.0
    %249 = vmatpush2.msra.mxu0 0.0
    %250 = vmatprep.mubr.f32.mxu0 0.0
    %251 = vmatmul.mubr.f32.gmra.mxu0 %v158
    %v252 = vpop.f32.mrf.mxu0
    %v253 = vadd.f32 %v184, %v252
    %v254 = vpop.f32.mrf.mxu0
    %255 = vmatprep.mubr.f32.mxu0 0.0
    %256 = vmatmul.mubr.f32.gmra.mxu0 %v159
    %v257 = vpop.f32.mrf.mxu0
    %v258 = vadd.f32 %v184, %v257
    %v259 = vpop.f32.mrf.mxu0
    %260 = vmatprep.mubr.f32.mxu0 0.0
    %261 = vmatmul.mubr.f32.gmra.mxu0 %v160
    %v262 = vpop.f32.mrf.mxu0
    %v263 = vadd.f32 %v184, %v262
    %v264 = vpop.f32.mrf.mxu0
    %265 = vmatprep.mubr.f32.mxu0 0.0
    %266 = vmatmul.mubr.f32.gmra.mxu0 %v161
    %v267 = vpop.f32.mrf.mxu0
    %v268 = vadd.f32 %v184, %v267
    %v269 = vpop.f32.mrf.mxu0
    %270 = vmatprep.mubr.f32.mxu0 0.0
    %271 = vmatmul.mubr.f32.gmra.mxu0 %v162
    %v272 = vpop.f32.mrf.mxu0
    %v273 = vadd.f32 %v184, %v272
    %v274 = vpop.f32.mrf.mxu0
    %275 = vdwg.mxu0
    %v276 = vmax.f32 %v253, 0.0
    %v277 = vmax.f32 %v258, 0.0
    %v278 = vmax.f32 %v263, 0.0
    %v279 = vmax.f32 %v268, 0.0
    %v280 = vmax.f32 %v273, 0.0
    %v281 = vld [vmem:[%s5] sm:$0x1]
    %s282 = sld [smem:[#allocation2]]
    %v283 = vstv %s282
    %284 = vmatprep.subr.mxu0 0.0
    %285 = vmatpush1.xpose.msra.mxu0 0.0
    %286 = vmatprep.subr.mxu0 0.0
    %287 = vmatpush1.xpose.msra.mxu0 0.0
    %288 = vmatprep.subr.mxu0 0.0
    %289 = vmatpush1.xpose.msra.mxu0 0.0
    %290 = vmatprep.subr.mxu0 0.0
    %291 = vmatpush1.xpose.msra.mxu0 0.0
    %292 = vmatprep.subr.mxu0 0.0
    %293 = vmatpush1.xpose.msra.mxu0 0.0
    %294 = vmatprep.subr.mxu0 0.0
    %295 = vmatpush1.xpose.msra.mxu0 0.0
    %296 = vmatprep.subr.mxu0 0.0
    %297 = vmatpush1.xpose.msra.mxu0 0.0
    %298 = vmatprep.subr.mxu0 0.0
    %299 = vmatpush1.xpose.msra.mxu0 0.0
    %300 = vmatprep.subr.mxu0 0.0
    %301 = vmatpush1.xpose.msra.mxu0 0.0
    %302 = vmatprep.subr.mxu0 0.0
    %303 = vmatpush1.xpose.msra.mxu0 0.0
    %304 = vmatprep.subr.mxu0 0.0
    %305 = vmatpush1.xpose.msra.mxu0 0.0
    %306 = vmatprep.subr.mxu0 0.0
    %307 = vmatpush1.xpose.msra.mxu0 %v280
    %308 = vmatprep.subr.mxu0 0.0
    %309 = vmatpush1.xpose.msra.mxu0 %v279
    %310 = vmatprep.subr.mxu0 0.0
    %311 = vmatpush1.xpose.msra.mxu0 %v278
    %312 = vmatprep.subr.mxu0 0.0
    %313 = vmatpush1.xpose.msra.mxu0 %v277
    %314 = vmatprep.subr.mxu0 0.0
    %315 = vmatpush1.xpose.msra.mxu0 %v276
    %316 = vmatprep.subr.mxu0 0.0
    %317 = vmatpush2.xpose.msra.mxu0 0.0
    %318 = vmatprep.subr.mxu0 0.0
    %319 = vmatpush2.xpose.msra.mxu0 0.0
    %320 = vmatprep.subr.mxu0 0.0
    %321 = vmatpush2.xpose.msra.mxu0 0.0
    %322 = vmatprep.subr.mxu0 0.0
    %323 = vmatpush2.xpose.msra.mxu0 0.0
    %324 = vmatprep.subr.mxu0 0.0
    %325 = vmatpush2.xpose.msra.mxu0 0.0
    %326 = vmatprep.subr.mxu0 0.0
    %327 = vmatpush2.xpose.msra.mxu0 0.0
    %328 = vmatprep.subr.mxu0 0.0
    %329 = vmatpush2.xpose.msra.mxu0 0.0
    %330 = vmatprep.subr.mxu0 0.0
    %331 = vmatpush2.xpose.msra.mxu0 0.0
    %332 = vmatprep.subr.mxu0 0.0
    %333 = vmatpush2.xpose.msra.mxu0 0.0
    %334 = vmatprep.subr.mxu0 0.0
    %335 = vmatpush2.xpose.msra.mxu0 0.0
    %336 = vmatprep.subr.mxu0 0.0
    %337 = vmatpush2.xpose.msra.mxu0 0.0
    %338 = vmatprep.subr.mxu0 0.0
    %339 = vmatpush2.xpose.msra.mxu0 0.0
    %340 = vmatprep.subr.mxu0 0.0
    %341 = vmatpush2.xpose.msra.mxu0 0.0
    %342 = vmatprep.subr.mxu0 0.0
    %343 = vmatpush2.xpose.msra.mxu0 0.0
    %344 = vmatprep.subr.mxu0 0.0
    %345 = vmatpush2.xpose.msra.mxu0 0.0
    %346 = vmatprep.subr.mxu0 0.0
    %347 = vmatpush2.xpose.msra.mxu0 0.0
    %348 = vmatprep.mubr.f32.mxu0 0.0
    %349 = vmatmul.mubr.f32.gmra.mxu0 %v281
    %v350 = vpop.f32.mrf.mxu0
    %v351 = vadd.f32 %v283, %v350
    %v352 = vpop.f32.mrf.mxu0
    %353 = vdwg.mxu0
    %vm354 = vcmask 319488
    %355 = vst.msk [vmem:[%s7] sm:$0x1] %vm354, %v351
    // Predicated region
    $region34: #{value_network_forward.1} parent=1 // pred_check
      _
    $region35: #{value_network_forward.1} parent=1 // pred_check_branch
      %357 = sbr.rel (0) target = $region37
    $region36: #{value_network_forward.1} parent=1 // pred_region
      _
    $region37: #{value_network_forward.1} parent=1 // pred_fallthru
      _
    // Predicated region
    $region38: #{value_network_forward.1} parent=1 // pred_check
      _
    $region39: #{value_network_forward.1} parent=1 // pred_check_branch
      %359 = sbr.rel (0) target = $region41
    $region40: #{value_network_forward.1} parent=1 // pred_region
      _
    $region41: #{value_network_forward.1} parent=1 // pred_fallthru
      _
    %360 = vsyncpa [#allocation4], 1

</llo_original>
